<compile_context>
chip_gen: v7x
topology: tpu7x:2x2x1
jax: 0.10.0
libtpu: 0.0.40
codegen_flags: <defaults>
</compile_context>

<pallas_src>
import numpy as np
import jax
import jax.numpy as jnp
from jax.experimental import pallas as pl
from jax.experimental.pallas import tpu as pltpu

_TWO_PI = 2.0 * np.pi


# ----------------------------------------------------------------------------
# Kernels
# ----------------------------------------------------------------------------
def _kernel_lane_batch(xt_ref, w_ref, out_ref):
    """Transposed layout (embed_dim < 128): lane axis = batch.

    xt_ref : (C, TB)         input, batch on the lane axis (lane-dense)
    w_ref  : (half, C)       pre-folded 2*pi*W
    out_ref: (2*half, TB)    rows [0,half)=sin, [half,2*half)=cos
    """
    xt = xt_ref[...].astype(jnp.float32)
    w = w_ref[...].astype(jnp.float32)
    half, C = w.shape

    if C <= 8:
        # Degenerate contraction: keep it on the VPU. xt[c:c+1, :] is a
        # lane-dense row; its (1,TB)->(half,TB) broadcast is a cheap sublane
        # broadcast.  The (half,1) weight column broadcast is C tiny ops/tile.
        acc = w[:, 0:1] * xt[0:1, :]
        for c in range(1, C):
            acc = acc + w[:, c:c + 1] * xt[c:c + 1, :]
        x_proj = acc
    else:
        x_proj = jnp.dot(w, xt, preferred_element_type=jnp.float32)

    s = jnp.sin(x_proj).astype(out_ref.dtype)
    co = jnp.cos(x_proj).astype(out_ref.dtype)
    if half % 8 == 0:
        # Two aligned sublane-slice stores; no concatenate temporary.
        out_ref[0:half, :] = s
        out_ref[half:2 * half, :] = co
    else:
        out_ref[...] = jnp.concatenate([s, co], axis=0)


def _kernel_lane_feature(x_ref, wt_ref, out_ref):
    """Standard layout (embed_dim >= 128): lane axis = features.

    x_ref  : (TB, C)
    wt_ref : (C, half)       pre-folded (2*pi*W).T
    out_ref: (TB, 2*half)
    """
    x = x_ref[...].astype(jnp.float32)
    wt = wt_ref[...].astype(jnp.float32)
    C, half = wt.shape

    if C <= 8:
        # Tiny contraction: VPU mul-adds instead of a K=4 MXU matmul.
        x_proj = x[:, 0:1] * wt[0:1, :]
        for c in range(1, C):
            x_proj = x_proj + x[:, c:c + 1] * wt[c:c + 1, :]
    else:
        x_proj = jnp.dot(x, wt, preferred_element_type=jnp.float32)

    s = jnp.sin(x_proj).astype(out_ref.dtype)
    co = jnp.cos(x_proj).astype(out_ref.dtype)
    if half % 128 == 0:
        # half is lane-aligned: two unmasked lane-dense slice stores,
        # no concatenate temporary (saves a full copy pass + vregs).
        out_ref[:, 0:half] = s
        out_ref[:, half:2 * half] = co
    else:
        out_ref[...] = jnp.concatenate([s, co], axis=-1)


# ----------------------------------------------------------------------------
# Init (folds 2*pi and both layouts ONCE; never on the forward path)
# ----------------------------------------------------------------------------
def init_positional_encoding(key, channels, embed_dim, scale=30.0, dtype=jnp.float32):
    """Mirror of the PyTorch __init__: frozen W = randn(embed_dim//2, channels)*scale."""
    W = jax.random.normal(key, (embed_dim // 2, channels), dtype=dtype) * scale
    w_hc = (_TWO_PI * W).astype(jnp.float32)   # (half, C)  -- small-embed (transposed) kernel
    w_ch = jnp.transpose(w_hc)                 # (C, half)  -- wide-embed kernel
    return {"W": W, "w_hc": w_hc, "w_ch": w_ch}


# ----------------------------------------------------------------------------
# Wrapper
# ----------------------------------------------------------------------------
def _pick_tile(n, bytes_per_row, *, align, max_tile, vmem_budget, split_threshold=256):
    """Largest batch tile (multiple of `align`, or == n) whose double-buffered
    blocks fit in `vmem_budget`; guarantees >= 2 grid steps for large n so the
    'parallel' axis can shard across v7x's two TensorCores."""
    limit = max(align, min(max_tile,
                           (vmem_budget // (2 * bytes_per_row)) // align * align))
    if n <= limit:
        if n >= split_threshold and n >= 2 * align:
            return max(align, (n // 2) // align * align)
        return n
    return limit


def positional_encoding(x, params, *, out_dtype=None, max_rows_per_tile=8192,
                        vmem_budget_bytes=8 << 20, return_transposed=False):
    """Forward pass.  x: (B, C) -> (B, embed_dim) = [sin(2*pi*x@W.T), cos(...)].

    out_dtype: pass jnp.bfloat16 if the consumer tolerates it (compute stays
    f32; halves HBM writeback for the mem-bound wide-embed case).
    return_transposed: small-embed path only -- return the lane-dense
    (embed_dim, B) slab directly and skip the wrapper transpose.
    """
    B, C = x.shape
    half = params["w_hc"].shape[0]
    embed_dim = 2 * half
    out_dtype = x.dtype if out_dtype is None else np.dtype(out_dtype)
    out_itemsize = np.dtype(out_dtype).itemsize
    in_itemsize = np.dtype(x.dtype).itemsize

    cost = pl.CostEstimate(
        flops=2 * B * C * half,
        transcendentals=2 * B * half,
        bytes_accessed=(B * C * in_itemsize
                        + C * half * np.dtype(params["w_hc"].dtype).itemsize
                        + B * embed_dim * out_itemsize),
    )
    bytes_per_row = C * in_itemsize + embed_dim * out_itemsize
    cparams = pltpu.CompilerParams(dimension_semantics=("parallel",))

    if embed_dim < 128:
        # Lane-sparse in the standard layout -> put BATCH on the lane axis so
        # sin/cos (single EUP) and the stores run on fully-live vregs.
        tb = _pick_tile(B, bytes_per_row, align=128, max_tile=max_rows_per_tile,
                        vmem_budget=vmem_budget_bytes)
        grid = (pl.cdiv(B, tb),)
        out_t = pl.pallas_call(
            _kernel_lane_batch,
            out_shape=jax.ShapeDtypeStruct((embed_dim, B), out_dtype),
            grid=grid,
            in_specs=[
                pl.BlockSpec((C, tb), lambda i: (0, i)),
                pl.BlockSpec((half, C), lambda i: (0, 0)),
            ],
            out_specs=pl.BlockSpec((embed_dim, tb), lambda i: (0, i)),
            compiler_params=cparams,
            cost_estimate=cost,
        )(x.T, params["w_hc"])
        return out_t if return_transposed else out_t.T

    # Wide embed_dim: feature axis is already lane-dense; HBM-writeback bound,
    # so use large row tiles to amortize per-grid-step overhead.
    tb = _pick_tile(B, bytes_per_row, align=8, max_tile=max_rows_per_tile,
                    vmem_budget=vmem_budget_bytes)
    grid = (pl.cdiv(B, tb),)
    return pl.pallas_call(
        _kernel_lane_feature,
        out_shape=jax.ShapeDtypeStruct((B, embed_dim), out_dtype),
        grid=grid,
        in_specs=[
            pl.BlockSpec((tb, C), lambda i: (i, 0)),
            pl.BlockSpec((C, half), lambda i: (0, 0)),
        ],
        out_specs=pl.BlockSpec((tb, embed_dim), lambda i: (i, 0)),
        compiler_params=cparams,
        cost_estimate=cost,
    )(x, params["w_ch"])


# ----------------------------------------------------------------------------
# Self-test
# ----------------------------------------------------------------------------
if __name__ == "__main__":
    def _ref(x, W):
        x64 = np.asarray(x, dtype=np.float64)
        W64 = np.asarray(W, dtype=np.float64)
        xp = (x64 @ W64.T) * _TWO_PI
        return np.concatenate([np.sin(xp), np.cos(xp)], axis=1)

    key = jax.random.PRNGKey(0)
    k_w, k_x, k_w2, k_x2 = jax.random.split(key, 4)

    # Small-embed config (exercises the transposed, lane-dense-batch kernel).
    batch, channels, embed_dim = 8, 4, 32
    params = init_positional_encoding(k_w, channels, embed_dim, scale=30.0)
    x = jax.random.normal(k_x, (batch, channels), dtype=jnp.float32)
    out = jax.block_until_ready(positional_encoding(x, params))
    assert out.shape == (batch, embed_dim)
    # f32 range-reduction on O(hundreds) sin/cos arguments -> ~1e-4 abs wiggle.
    np.testing.assert_allclose(np.asarray(out), _ref(x, params["W"]),
                               rtol=1e-4, atol=1e-3)

    # Wide-embed config (exercises the lane-dense slice-store kernel).
    batch2, channels2, embed_dim2 = 16, 4, 256
    params2 = init_positional_encoding(k_w2, channels2, embed_dim2, scale=30.0)
    x2 = jax.random.normal(k_x2, (batch2, channels2), dtype=jnp.float32)
    out2 = jax.block_until_ready(positional_encoding(x2, params2))
    assert out2.shape == (batch2, embed_dim2)
    np.testing.assert_allclose(np.asarray(out2), _ref(x2, params2["W"]),
                               rtol=1e-4, atol=1e-3)

    print("KERNEL_OK")
</pallas_src>

<mosaic_0001>
module attributes {stable_mosaic.version = 11 : i64} {
  func.func @_kernel_lane_batch(%arg0: i32, %arg1: memref<4x8xf32, #tpu.memory_space<vmem>>, %arg2: memref<16x4xf32, #tpu.memory_space<vmem>>, %arg3: memref<32x8xf32, #tpu.memory_space<vmem>>) attributes {dimension_semantics = [#tpu.dimension_semantics<parallel>], iteration_bounds = array<i64: 1>, scalar_prefetch = 0 : i64, scratch_operands = 0 : i64, tpu.core_type = #tpu.core_type<tc>, window_params = [{transform_indices = @transform_0, window_bounds = array<i64: 4, 8>}, {pipeline_mode = #tpu.pipeline_mode<synchronous>, transform_indices = @transform_1, window_bounds = array<i64: 16, 4>}, {transform_indices = @transform_2, window_bounds = array<i64: 32, 8>}]} {
    %c0 = arith.constant 0 : index
    %c0_0 = arith.constant 0 : index
    %0 = vector.load %arg1[%c0, %c0_0] : memref<4x8xf32, #tpu.memory_space<vmem>>, vector<4x8xf32>
    %c0_1 = arith.constant 0 : index
    %c0_2 = arith.constant 0 : index
    %1 = vector.load %arg2[%c0_1, %c0_2] : memref<16x4xf32, #tpu.memory_space<vmem>>, vector<16x4xf32>
    %2 = vector.extract_strided_slice %1 {offsets = [0, 0], sizes = [16, 1], strides = [1, 1]} : vector<16x4xf32> to vector<16x1xf32>
    %3 = vector.extract_strided_slice %0 {offsets = [0, 0], sizes = [1, 8], strides = [1, 1]} : vector<4x8xf32> to vector<1x8xf32>
    %4 = vector.broadcast %2 : vector<16x1xf32> to vector<16x8xf32>
    %5 = vector.broadcast %3 : vector<1x8xf32> to vector<16x8xf32>
    %6 = arith.mulf %4, %5 : vector<16x8xf32>
    %7 = vector.extract_strided_slice %1 {offsets = [0, 1], sizes = [16, 1], strides = [1, 1]} : vector<16x4xf32> to vector<16x1xf32>
    %8 = vector.extract_strided_slice %0 {offsets = [1, 0], sizes = [1, 8], strides = [1, 1]} : vector<4x8xf32> to vector<1x8xf32>
    %9 = vector.broadcast %7 : vector<16x1xf32> to vector<16x8xf32>
    %10 = vector.broadcast %8 : vector<1x8xf32> to vector<16x8xf32>
    %11 = arith.mulf %9, %10 : vector<16x8xf32>
    %12 = arith.addf %6, %11 : vector<16x8xf32>
    %13 = vector.extract_strided_slice %1 {offsets = [0, 2], sizes = [16, 1], strides = [1, 1]} : vector<16x4xf32> to vector<16x1xf32>
    %14 = vector.extract_strided_slice %0 {offsets = [2, 0], sizes = [1, 8], strides = [1, 1]} : vector<4x8xf32> to vector<1x8xf32>
    %15 = vector.broadcast %13 : vector<16x1xf32> to vector<16x8xf32>
    %16 = vector.broadcast %14 : vector<1x8xf32> to vector<16x8xf32>
    %17 = arith.mulf %15, %16 : vector<16x8xf32>
    %18 = arith.addf %12, %17 : vector<16x8xf32>
    %19 = vector.extract_strided_slice %1 {offsets = [0, 3], sizes = [16, 1], strides = [1, 1]} : vector<16x4xf32> to vector<16x1xf32>
    %20 = vector.extract_strided_slice %0 {offsets = [3, 0], sizes = [1, 8], strides = [1, 1]} : vector<4x8xf32> to vector<1x8xf32>
    %21 = vector.broadcast %19 : vector<16x1xf32> to vector<16x8xf32>
    %22 = vector.broadcast %20 : vector<1x8xf32> to vector<16x8xf32>
    %23 = arith.mulf %21, %22 : vector<16x8xf32>
    %24 = arith.addf %18, %23 : vector<16x8xf32>
    %25 = math.sin %24 : vector<16x8xf32>
    %26 = math.cos %24 : vector<16x8xf32>
    %c0_3 = arith.constant 0 : index
    %c0_4 = arith.constant 0 : index
    %27 = vector.load %arg3[%c0_3, %c0_4] : memref<32x8xf32, #tpu.memory_space<vmem>>, vector<16x8xf32>
    tpu.vector_store %arg3[%c0_3, %c0_4], %25 {strides = array<i32>} : memref<32x8xf32, #tpu.memory_space<vmem>>, vector<16x8xf32>,
    %c16 = arith.constant 16 : index
    %c0_5 = arith.constant 0 : index
    %28 = vector.load %arg3[%c16, %c0_5] : memref<32x8xf32, #tpu.memory_space<vmem>>, vector<16x8xf32>
    tpu.vector_store %arg3[%c16, %c0_5], %26 {strides = array<i32>} : memref<32x8xf32, #tpu.memory_space<vmem>>, vector<16x8xf32>,
    return
  }
  func.func @transform_0(%arg0: i32) -> (i32, i32) {
    %c0_i32 = arith.constant 0 : i32
    %c0_i32_0 = arith.constant 0 : i32
    return %c0_i32, %arg0 : i32, i32
  }
  func.func @transform_1(%arg0: i32) -> (i32, i32) {
    %c0_i32 = arith.constant 0 : i32
    %c0_i32_0 = arith.constant 0 : i32
    %c0_i32_1 = arith.constant 0 : i32
    return %c0_i32, %c0_i32_0 : i32, i32
  }
  func.func @transform_2(%arg0: i32) -> (i32, i32) {
    %c0_i32 = arith.constant 0 : i32
    %c0_i32_0 = arith.constant 0 : i32
    return %c0_i32, %arg0 : i32, i32
  }
}

</mosaic_0001>

<llo_original>
// kernel: tpu_custom_call.1
$region0: #{tpu_custom_call.1}
  #allocation0 [shape = 'u32[]', space=smem, size = 0x4, offset = 0x4, fixed_abs, tag = 'smem constant byte address 0x4 - core index']
  #allocation1 [shape = 'u32[144,128]{1,0:T(1,128)}', space=vmem, size = 0x12000, scoped, tag = 'internal scratch']
  %s0 = inlined_call_operand.vmem [shape: f32[4,8], index: 0, kind: input, shape index: {}]
  %s1 = inlined_call_operand.vmem [shape: f32[16,4], index: 1, kind: input, shape index: {}]
  %s2 = inlined_call_operand.vmem [shape: f32[32,8], index: 2, kind: output, shape index: {}]
  %s3 = sld [smem:[#allocation0]]
  $region18: #{tpu_custom_call.1} parent=0
    _
  %s5 = ssub.s32 1, %s3
  %s6 = scalar_select 0, %s5, %s3
  // Predicated region
  $region2: #{tpu_custom_call.1} parent=0 // pred_check
    _
  $region3: #{tpu_custom_call.1} parent=0 // pred_check_branch
    %8 = sbr.rel (0) target = $region5
  $region4: #{tpu_custom_call.1} parent=0 // pred_region
    _
  $region5: #{tpu_custom_call.1} parent=0 // pred_fallthru
    _
  // Predicated region
  $region6: #{tpu_custom_call.1} parent=0 // pred_check
    _
  $region7: #{tpu_custom_call.1} parent=0 // pred_check_branch
    %10 = sbr.rel (0) target = $region9
  $region8: #{tpu_custom_call.1} parent=0 // pred_region
    _
  $region9: #{tpu_custom_call.1} parent=0 // pred_fallthru
    _
  %v11 = vld [vmem:[%s0] sm:$0xf]
  %v12 = vld [vmem:[%s1] sm:$0xff]
  %v13 = vld [vmem:[%s1 + $0x8] sm:$0xff]
  %15 = vset.pattern.permute.xlu0 0
  %16 = vperm.xlu0 %15, %v12
  %v17 = vpop.permute.xlu0 %16
  %20 = vset.pattern.permute.xlu0 0
  %21 = vperm.xlu0 %20, %v13
  %v22 = vpop.permute.xlu0 %21
  %v24 = vlaneseq
  %v25 = vshrl.u32 %v24, 7
  %v26 = vsub.s32 0, %v25
  %v27 = vrot.slane %v11, %v26
  %v28 = vmul.f32 %v17, %v27
  %v29 = vmul.f32 %v22, %v27
  %30 = vset.pattern.permute.xlu0 1
  %31 = vperm.xlu0 %30, %v12
  %v32 = vpop.permute.xlu0 %31
  %34 = vset.pattern.permute.xlu0 1
  %35 = vperm.xlu0 %34, %v13
  %v36 = vpop.permute.xlu0 %35
  %v38 = vlaneseq
  %v39 = vshrl.u32 %v38, 7
  %v40 = vsub.s32 1, %v39
  %v41 = vrot.slane %v11, %v40
  %v42 = vmul.f32 %v32, %v41
  %v43 = vmul.f32 %v36, %v41
  %v44 = vadd.f32 %v28, %v42
  %v45 = vadd.f32 %v29, %v43
  %46 = vset.pattern.permute.xlu0 2
  %47 = vperm.xlu0 %46, %v12
  %v48 = vpop.permute.xlu0 %47
  %50 = vset.pattern.permute.xlu0 2
  %51 = vperm.xlu0 %50, %v13
  %v52 = vpop.permute.xlu0 %51
  %v54 = vlaneseq
  %v55 = vshrl.u32 %v54, 7
  %v56 = vsub.s32 2, %v55
  %v57 = vrot.slane %v11, %v56
  %v58 = vmul.f32 %v48, %v57
  %v59 = vmul.f32 %v52, %v57
  %v60 = vadd.f32 %v44, %v58
  %v61 = vadd.f32 %v45, %v59
  %62 = vset.pattern.permute.xlu0 3
  %63 = vperm.xlu0 %62, %v12
  %v64 = vpop.permute.xlu0 %63
  %66 = vset.pattern.permute.xlu0 3
  %67 = vperm.xlu0 %66, %v13
  %v68 = vpop.permute.xlu0 %67
  %v70 = vlaneseq
  %v71 = vshrl.u32 %v70, 7
  %v72 = vsub.s32 3, %v71
  %v73 = vrot.slane %v11, %v72
  %v74 = vmul.f32 %v64, %v73
  %v75 = vmul.f32 %v68, %v73
  %v76 = vadd.f32 %v60, %v74
  %v77 = vadd.f32 %v61, %v75
  %v78 = vand.u32 2147483647, %v76
  %vm79 = vcmp.le.f32.partialorder %v78, 0.7853982
  %vm80 = vcmp.lt.s32.totalorder %v76, 0
  %v81 = vand.u32 %v76, 2139095040
  %v82 = vshrl.u32 %v81, 23
  %v83 = vsub.s32 %v82, 127
  %v84 = vand.u32 2147483647, %v76
  %v85 = vand.u32 %v84, 8388607
  %v86 = vor.u32 %v85, 8388608
  %v87 = vsub.s32 0, %v86
  %v88 = vadd.s32 %v83, 1
  %vm89 = vcmp.gt.s32.totalorder %v88, 0
  %v90 = vsel %vm89, %v88, 0
  %v91 = vshrl.u32 %v90, 5
  %v92 = vand.u32 %v90, 31
  %v93 = vsub.s32 32, %v92
  %v94 = vshrl.u32 683565275, %v93
  %v95 = vshll.u32 683565275, %v92
  %v96 = vshrl.u32 2475754826, %v93
  %v97 = vor.u32 %v95, %v96
  %v98 = vshll.u32 2475754826, %v92
  %v99 = vshrl.u32 2131351028, %v93
  %v100 = vor.u32 %v98, %v99
  %v101 = vshll.u32 2131351028, %v92
  %v102 = vshrl.u32 2102212464, %v93
  %v103 = vor.u32 %v101, %v102
  %v104 = vshll.u32 2102212464, %v92
  %v105 = vshrl.u32 920167782, %v93
  %v106 = vor.u32 %v104, %v105
  %v107 = vshll.u32 920167782, %v92
  %v108 = vshrl.u32 1326507024, %v93
  %v109 = vor.u32 %v107, %v108
  %vm110 = vcmp.lt.s32.totalorder %v91, 1
  %vm111 = vcmp.lt.s32.totalorder %v91, 2
  %vm112 = vcmp.lt.s32.totalorder %v91, 3
  %vm113 = vcmp.lt.s32.totalorder %v91, 4
  %v114 = vsel %vm110, %v94, %v97
  %v115 = vsel %vm113, %v103, 2102212464
  %v116 = vsel %vm112, %v100, %v115
  %v117 = vsel %vm111, %v114, %v116
  %v118 = vsel %vm110, %v97, %v100
  %v119 = vsel %vm113, %v106, 920167782
  %v120 = vsel %vm112, %v103, %v119
  %v121 = vsel %vm111, %v118, %v120
  %v122 = vsel %vm110, %v100, %v103
  %v123 = vsel %vm113, %v109, 1326507024
  %v124 = vsel %vm112, %v106, %v123
  %v125 = vsel %vm111, %v122, %v124
  %v126 = vshll.u32 %v86, 8
  %v127 = vmul.u32.u64.compose %v126, %v125
  %v128 = vextract.low.u32 %v127
  %v129 = vextract.high.u32 %v127
  %v130 = vmul.u32.u64.compose %v126, %v121
  %v131 = vextract.low.u32 %v130
  %v132 = vextract.high.u32 %v130
  %v133 = vmul.u32 %v126, %v117
  %v134 = vadd.s32 %v129, %v131
  %vm135 = vc.u32 %v129, %v131
  %v136 = vadd.s32 %v132, 1
  %v137 = vsel %vm135, %v136, %v132
  %v138 = vadd.s32 %v133, %v137
  %v139 = vadd.s32 %v138, 536870912
  %v140 = vshrl.u32 %v139, 30
  %v141 = vshll.u32 %v140, 30
  %v142 = vsub.s32 %v138, %v141
  %vm143 = vcmp.lt.s32.totalorder %v142, 0
  %v144 = vsub.s32 0, %v142
  %v145 = vsel %vm143, %v144, %v142
  %v146 = vclz %v145
  %v147 = vsub.s32 %v146, 2
  %vm148 = vcmp.gt.s32.totalorder 0, %v147
  %v149 = vsel %vm148, 0, %v147
  %v150 = vsub.s32 32, %v149
  %v151 = vshll.u32 %v142, %v149
  %v152 = vshrl.u32 %v134, %v150
  %v153 = vor.u32 %v151, %v152
  %v154 = vsub.s32 4294967266, %v149
  %v155 = vadd.s32 %v154, 127
  %v156 = vshll.u32 %v155, 23
  %v157 = vor.u32 4788187, %v156
  %v158 = vand.u32 2147483647, %v157
  %v160 = vcvt.s32.f32 %v153
  %v161 = vmul.f32 %v160, %v158
  %v162 = vxor.u32 %v161, 2147483648
  %v163 = vsel %vm80, %v162, %v161
  %v164 = vsub.s32 4, %v140
  %v165 = vsel %vm80, %v164, %v140
  %v166 = vsel %vm79, %v76, %v163
  %v167 = vsel %vm79, 0, %v165
  %v168 = vcosq.f32.pop %v166
  %v169 = vsinq.f32.pop %v166
  %vm170 = vweird.f32 %v76
  %v171 = vadd.s32 %v167, 3
  %v172 = vand.u32 %v171, 3
  %vm173 = vcmp.lt.s32.totalorder %v172, 2
  %vm174 = vcmp.eq.s32.totalorder %v172, 0
  %v175 = vxor.u32 %v169, 2147483648
  %v176 = vsel %vm174, %v168, %v175
  %vm177 = vcmp.eq.s32.totalorder %v172, 2
  %v178 = vxor.u32 %v168, 2147483648
  %v179 = vsel %vm177, %v178, %v169
  %v180 = vsel %vm173, %v176, %v179
  %v181 = vsel %vm170, nan, %v180
  %v182 = vand.u32 2147483647, %v77
  %vm183 = vcmp.le.f32.partialorder %v182, 0.7853982
  %vm184 = vcmp.lt.s32.totalorder %v77, 0
  %v185 = vand.u32 %v77, 2139095040
  %v186 = vshrl.u32 %v185, 23
  %v187 = vsub.s32 %v186, 127
  %v188 = vand.u32 2147483647, %v77
  %v189 = vand.u32 %v188, 8388607
  %v190 = vor.u32 %v189, 8388608
  %v191 = vsub.s32 0, %v190
  %v192 = vadd.s32 %v187, 1
  %vm193 = vcmp.gt.s32.totalorder %v192, 0
  %v194 = vsel %vm193, %v192, 0
  %v195 = vshrl.u32 %v194, 5
  %v196 = vand.u32 %v194, 31
  %v197 = vsub.s32 32, %v196
  %v198 = vshrl.u32 683565275, %v197
  %v199 = vshll.u32 683565275, %v196
  %v200 = vshrl.u32 2475754826, %v197
  %v201 = vor.u32 %v199, %v200
  %v202 = vshll.u32 2475754826, %v196
  %v203 = vshrl.u32 2131351028, %v197
  %v204 = vor.u32 %v202, %v203
  %v205 = vshll.u32 2131351028, %v196
  %v206 = vshrl.u32 2102212464, %v197
  %v207 = vor.u32 %v205, %v206
  %v208 = vshll.u32 2102212464, %v196
  %v209 = vshrl.u32 920167782, %v197
  %v210 = vor.u32 %v208, %v209
  %v211 = vshll.u32 920167782, %v196
  %v212 = vshrl.u32 1326507024, %v197
  %v213 = vor.u32 %v211, %v212
  %vm214 = vcmp.lt.s32.totalorder %v195, 1
  %vm215 = vcmp.lt.s32.totalorder %v195, 2
  %vm216 = vcmp.lt.s32.totalorder %v195, 3
  %vm217 = vcmp.lt.s32.totalorder %v195, 4
  %v218 = vsel %vm214, %v198, %v201
  %v219 = vsel %vm217, %v207, 2102212464
  %v220 = vsel %vm216, %v204, %v219
  %v221 = vsel %vm215, %v218, %v220
  %v222 = vsel %vm214, %v201, %v204
  %v223 = vsel %vm217, %v210, 920167782
  %v224 = vsel %vm216, %v207, %v223
  %v225 = vsel %vm215, %v222, %v224
  %v226 = vsel %vm214, %v204, %v207
  %v227 = vsel %vm217, %v213, 1326507024
  %v228 = vsel %vm216, %v210, %v227
  %v229 = vsel %vm215, %v226, %v228
  %v230 = vshll.u32 %v190, 8
  %v231 = vmul.u32.u64.compose %v230, %v229
  %v232 = vextract.low.u32 %v231
  %v233 = vextract.high.u32 %v231
  %v234 = vmul.u32.u64.compose %v230, %v225
  %v235 = vextract.low.u32 %v234
  %v236 = vextract.high.u32 %v234
  %v237 = vmul.u32 %v230, %v221
  %v238 = vadd.s32 %v233, %v235
  %vm239 = vc.u32 %v233, %v235
  %v240 = vadd.s32 %v236, 1
  %v241 = vsel %vm239, %v240, %v236
  %v242 = vadd.s32 %v237, %v241
  %v243 = vadd.s32 %v242, 536870912
  %v244 = vshrl.u32 %v243, 30
  %v245 = vshll.u32 %v244, 30
  %v246 = vsub.s32 %v242, %v245
  %vm247 = vcmp.lt.s32.totalorder %v246, 0
  %v248 = vsub.s32 0, %v246
  %v249 = vsel %vm247, %v248, %v246
  %v250 = vclz %v249
  %v251 = vsub.s32 %v250, 2
  %vm252 = vcmp.gt.s32.totalorder 0, %v251
  %v253 = vsel %vm252, 0, %v251
  %v254 = vsub.s32 32, %v253
  %v255 = vshll.u32 %v246, %v253
  %v256 = vshrl.u32 %v238, %v254
  %v257 = vor.u32 %v255, %v256
  %v258 = vsub.s32 4294967266, %v253
  %v259 = vadd.s32 %v258, 127
  %v260 = vshll.u32 %v259, 23
  %v261 = vor.u32 4788187, %v260
  %v262 = vand.u32 2147483647, %v261
  %v264 = vcvt.s32.f32 %v257
  %v265 = vmul.f32 %v264, %v262
  %v266 = vxor.u32 %v265, 2147483648
  %v267 = vsel %vm184, %v266, %v265
  %v268 = vsub.s32 4, %v244
  %v269 = vsel %vm184, %v268, %v244
  %v270 = vsel %vm183, %v77, %v267
  %v271 = vsel %vm183, 0, %v269
  %v272 = vcosq.f32.pop %v270
  %v273 = vsinq.f32.pop %v270
  %vm274 = vweird.f32 %v77
  %v275 = vadd.s32 %v271, 3
  %v276 = vand.u32 %v275, 3
  %vm277 = vcmp.lt.s32.totalorder %v276, 2
  %vm278 = vcmp.eq.s32.totalorder %v276, 0
  %v279 = vxor.u32 %v273, 2147483648
  %v280 = vsel %vm278, %v272, %v279
  %vm281 = vcmp.eq.s32.totalorder %v276, 2
  %v282 = vxor.u32 %v272, 2147483648
  %v283 = vsel %vm281, %v282, %v273
  %v284 = vsel %vm277, %v280, %v283
  %v285 = vsel %vm274, nan, %v284
  %v286 = vand.u32 2147483647, %v76
  %vm287 = vcmp.le.f32.partialorder %v286, 0.7853982
  %vm288 = vcmp.lt.s32.totalorder %v76, 0
  %v289 = vand.u32 %v76, 2139095040
  %v290 = vshrl.u32 %v289, 23
  %v291 = vsub.s32 %v290, 127
  %v292 = vand.u32 2147483647, %v76
  %v293 = vand.u32 %v292, 8388607
  %v294 = vor.u32 %v293, 8388608
  %v295 = vsub.s32 0, %v294
  %v296 = vadd.s32 %v291, 1
  %vm297 = vcmp.gt.s32.totalorder %v296, 0
  %v298 = vsel %vm297, %v296, 0
  %v299 = vshrl.u32 %v298, 5
  %v300 = vand.u32 %v298, 31
  %v301 = vsub.s32 32, %v300
  %v302 = vshrl.u32 683565275, %v301
  %v303 = vshll.u32 683565275, %v300
  %v304 = vshrl.u32 2475754826, %v301
  %v305 = vor.u32 %v303, %v304
  %v306 = vshll.u32 2475754826, %v300
  %v307 = vshrl.u32 2131351028, %v301
  %v308 = vor.u32 %v306, %v307
  %v309 = vshll.u32 2131351028, %v300
  %v310 = vshrl.u32 2102212464, %v301
  %v311 = vor.u32 %v309, %v310
  %v312 = vshll.u32 2102212464, %v300
  %v313 = vshrl.u32 920167782, %v301
  %v314 = vor.u32 %v312, %v313
  %v315 = vshll.u32 920167782, %v300
  %v316 = vshrl.u32 1326507024, %v301
  %v317 = vor.u32 %v315, %v316
  %vm318 = vcmp.lt.s32.totalorder %v299, 1
  %vm319 = vcmp.lt.s32.totalorder %v299, 2
  %vm320 = vcmp.lt.s32.totalorder %v299, 3
  %vm321 = vcmp.lt.s32.totalorder %v299, 4
  %v322 = vsel %vm318, %v302, %v305
  %v323 = vsel %vm321, %v311, 2102212464
  %v324 = vsel %vm320, %v308, %v323
  %v325 = vsel %vm319, %v322, %v324
  %v326 = vsel %vm318, %v305, %v308
  %v327 = vsel %vm321, %v314, 920167782
  %v328 = vsel %vm320, %v311, %v327
  %v329 = vsel %vm319, %v326, %v328
  %v330 = vsel %vm318, %v308, %v311
  %v331 = vsel %vm321, %v317, 1326507024
  %v332 = vsel %vm320, %v314, %v331
  %v333 = vsel %vm319, %v330, %v332
  %v334 = vshll.u32 %v294, 8
  %v335 = vmul.u32.u64.compose %v334, %v333
  %v336 = vextract.low.u32 %v335
  %v337 = vextract.high.u32 %v335
  %v338 = vmul.u32.u64.compose %v334, %v329
  %v339 = vextract.low.u32 %v338
  %v340 = vextract.high.u32 %v338
  %v341 = vmul.u32 %v334, %v325
  %v342 = vadd.s32 %v337, %v339
  %vm343 = vc.u32 %v337, %v339
  %v344 = vadd.s32 %v340, 1
  %v345 = vsel %vm343, %v344, %v340
  %v346 = vadd.s32 %v341, %v345
  %v347 = vadd.s32 %v346, 536870912
  %v348 = vshrl.u32 %v347, 30
  %v349 = vshll.u32 %v348, 30
  %v350 = vsub.s32 %v346, %v349
  %vm351 = vcmp.lt.s32.totalorder %v350, 0
  %v352 = vsub.s32 0, %v350
  %v353 = vsel %vm351, %v352, %v350
  %v354 = vclz %v353
  %v355 = vsub.s32 %v354, 2
  %vm356 = vcmp.gt.s32.totalorder 0, %v355
  %v357 = vsel %vm356, 0, %v355
  %v358 = vsub.s32 32, %v357
  %v359 = vshll.u32 %v350, %v357
  %v360 = vshrl.u32 %v342, %v358
  %v361 = vor.u32 %v359, %v360
  %v362 = vsub.s32 4294967266, %v357
  %v363 = vadd.s32 %v362, 127
  %v364 = vshll.u32 %v363, 23
  %v365 = vor.u32 4788187, %v364
  %v366 = vand.u32 2147483647, %v365
  %v368 = vcvt.s32.f32 %v361
  %v369 = vmul.f32 %v368, %v366
  %v370 = vxor.u32 %v369, 2147483648
  %v371 = vsel %vm288, %v370, %v369
  %v372 = vsub.s32 4, %v348
  %v373 = vsel %vm288, %v372, %v348
  %v374 = vsel %vm287, %v76, %v371
  %v375 = vsel %vm287, 0, %v373
  %v376 = vcosq.f32.pop %v374
  %v377 = vsinq.f32.pop %v374
  %vm378 = vweird.f32 %v76
  %v379 = vand.u32 %v375, 3
  %vm380 = vcmp.lt.s32.totalorder %v379, 2
  %vm381 = vcmp.eq.s32.totalorder %v379, 0
  %v382 = vxor.u32 %v377, 2147483648
  %v383 = vsel %vm381, %v376, %v382
  %vm384 = vcmp.eq.s32.totalorder %v379, 2
  %v385 = vxor.u32 %v376, 2147483648
  %v386 = vsel %vm384, %v385, %v377
  %v387 = vsel %vm380, %v383, %v386
  %v388 = vsel %vm378, nan, %v387
  %v389 = vand.u32 2147483647, %v77
  %vm390 = vcmp.le.f32.partialorder %v389, 0.7853982
  %vm391 = vcmp.lt.s32.totalorder %v77, 0
  %v392 = vand.u32 %v77, 2139095040
  %v393 = vshrl.u32 %v392, 23
  %v394 = vsub.s32 %v393, 127
  %v395 = vand.u32 2147483647, %v77
  %v396 = vand.u32 %v395, 8388607
  %v397 = vor.u32 %v396, 8388608
  %v398 = vsub.s32 0, %v397
  %v399 = vadd.s32 %v394, 1
  %vm400 = vcmp.gt.s32.totalorder %v399, 0
  %v401 = vsel %vm400, %v399, 0
  %v402 = vshrl.u32 %v401, 5
  %v403 = vand.u32 %v401, 31
  %v404 = vsub.s32 32, %v403
  %v405 = vshrl.u32 683565275, %v404
  %v406 = vshll.u32 683565275, %v403
  %v407 = vshrl.u32 2475754826, %v404
  %v408 = vor.u32 %v406, %v407
  %v409 = vshll.u32 2475754826, %v403
  %v410 = vshrl.u32 2131351028, %v404
  %v411 = vor.u32 %v409, %v410
  %v412 = vshll.u32 2131351028, %v403
  %v413 = vshrl.u32 2102212464, %v404
  %v414 = vor.u32 %v412, %v413
  %v415 = vshll.u32 2102212464, %v403
  %v416 = vshrl.u32 920167782, %v404
  %v417 = vor.u32 %v415, %v416
  %v418 = vshll.u32 920167782, %v403
  %v419 = vshrl.u32 1326507024, %v404
  %v420 = vor.u32 %v418, %v419
  %vm421 = vcmp.lt.s32.totalorder %v402, 1
  %vm422 = vcmp.lt.s32.totalorder %v402, 2
  %vm423 = vcmp.lt.s32.totalorder %v402, 3
  %vm424 = vcmp.lt.s32.totalorder %v402, 4
  %v425 = vsel %vm421, %v405, %v408
  %v426 = vsel %vm424, %v414, 2102212464
  %v427 = vsel %vm423, %v411, %v426
  %v428 = vsel %vm422, %v425, %v427
  %v429 = vsel %vm421, %v408, %v411
  %v430 = vsel %vm424, %v417, 920167782
  %v431 = vsel %vm423, %v414, %v430
  %v432 = vsel %vm422, %v429, %v431
  %v433 = vsel %vm421, %v411, %v414
  %v434 = vsel %vm424, %v420, 1326507024
  %v435 = vsel %vm423, %v417, %v434
  %v436 = vsel %vm422, %v433, %v435
  %v437 = vshll.u32 %v397, 8
  %v438 = vmul.u32.u64.compose %v437, %v436
  %v439 = vextract.low.u32 %v438
  %v440 = vextract.high.u32 %v438
  %v441 = vmul.u32.u64.compose %v437, %v432
  %v442 = vextract.low.u32 %v441
  %v443 = vextract.high.u32 %v441
  %v444 = vmul.u32 %v437, %v428
  %v445 = vadd.s32 %v440, %v442
  %vm446 = vc.u32 %v440, %v442
  %v447 = vadd.s32 %v443, 1
  %v448 = vsel %vm446, %v447, %v443
  %v449 = vadd.s32 %v444, %v448
  %v450 = vadd.s32 %v449, 536870912
  %v451 = vshrl.u32 %v450, 30
  %v452 = vshll.u32 %v451, 30
  %v453 = vsub.s32 %v449, %v452
  %vm454 = vcmp.lt.s32.totalorder %v453, 0
  %v455 = vsub.s32 0, %v453
  %v456 = vsel %vm454, %v455, %v453
  %v457 = vclz %v456
  %v458 = vsub.s32 %v457, 2
  %vm459 = vcmp.gt.s32.totalorder 0, %v458
  %v460 = vsel %vm459, 0, %v458
  %v461 = vsub.s32 32, %v460
  %v462 = vshll.u32 %v453, %v460
  %v463 = vshrl.u32 %v445, %v461
  %v464 = vor.u32 %v462, %v463
  %v465 = vsub.s32 4294967266, %v460
  %v466 = vadd.s32 %v465, 127
  %v467 = vshll.u32 %v466, 23
  %v468 = vor.u32 4788187, %v467
  %v469 = vand.u32 2147483647, %v468
  %v471 = vcvt.s32.f32 %v464
  %v472 = vmul.f32 %v471, %v469
  %v473 = vxor.u32 %v472, 2147483648
  %v474 = vsel %vm391, %v473, %v472
  %v475 = vsub.s32 4, %v451
  %v476 = vsel %vm391, %v475, %v451
  %v477 = vsel %vm390, %v77, %v474
  %v478 = vsel %vm390, 0, %v476
  %v479 = vcosq.f32.pop %v477
  %v480 = vsinq.f32.pop %v477
  %vm481 = vweird.f32 %v77
  %v482 = vand.u32 %v478, 3
  %vm483 = vcmp.lt.s32.totalorder %v482, 2
  %vm484 = vcmp.eq.s32.totalorder %v482, 0
  %v485 = vxor.u32 %v480, 2147483648
  %v486 = vsel %vm484, %v479, %v485
  %vm487 = vcmp.eq.s32.totalorder %v482, 2
  %v488 = vxor.u32 %v479, 2147483648
  %v489 = vsel %vm487, %v488, %v480
  %v490 = vsel %vm483, %v486, %v489
  %v491 = vsel %vm481, nan, %v490
  %vm492 = vcmask 64512
  %493 = vst.msk [vmem:[%s2] sm:$0xff] %vm492, %v181
  %494 = vst.msk [vmem:[%s2 + $0x8] sm:$0xff] %vm492, %v285
  %495 = vst.msk [vmem:[%s2 + $0x10] sm:$0xff] %vm492, %v388
  %496 = vst.msk [vmem:[%s2 + $0x18] sm:$0xff] %vm492, %v491
  // Predicated region
  $region10: #{tpu_custom_call.1} parent=0 // pred_check
    _
  $region11: #{tpu_custom_call.1} parent=0 // pred_check_branch
    %498 = sbr.rel (0) target = $region13
  $region12: #{tpu_custom_call.1} parent=0 // pred_region
    _
  $region13: #{tpu_custom_call.1} parent=0 // pred_fallthru
    _
  // Predicated region
  $region14: #{tpu_custom_call.1} parent=0 // pred_check
    _
  $region15: #{tpu_custom_call.1} parent=0 // pred_check_branch
    %500 = sbr.rel (0) target = $region17
  $region16: #{tpu_custom_call.1} parent=0 // pred_region
    _
  $region17: #{tpu_custom_call.1} parent=0 // pred_fallthru
    _

</llo_original>
